<compile_context>
chip_gen: v7x
topology: tpu7x:2x2x1
jax: 0.10.0
libtpu: 0.0.40
codegen_flags: <defaults>
</compile_context>

<pallas_src>
import jax
import jax.numpy as jnp
from jax.experimental import pallas as pl
from jax.experimental.pallas import tpu as pltpu


# ----------------------------------------------------------------------------
# Kernels
# ----------------------------------------------------------------------------
def _attention_kernel_nomask(x_ref, w_ref, b_ref, o_ref):
    """x_ref: (TB, S, F)  w_ref: (1, 1, F)  b_ref: (1, S, 1)  o_ref: (TB, 1, F)."""
    x = x_ref[...].astype(jnp.float32)                 # (TB, S, F)
    w = w_ref[...].astype(jnp.float32)                 # (1, 1, F)
    b = b_ref[...].astype(jnp.float32)                 # (1, S, 1)

    # eij = mm(x.view(-1, F), weight).view(-1, S) + b; kept sublane-major as
    # (TB, S, 1): VPU multiply + cross-lane reduce, no MXU, no relayout.
    eij = jnp.sum(x * w, axis=-1, keepdims=True)       # (TB, S, 1)

    # a = exp(tanh(eij + b))
    a = jnp.exp(jnp.tanh(eij + b))                     # (TB, S, 1)

    # a = a / sum(a, 1, keepdim=True) + 1e-10  (+1e-10 AFTER the divide, as in
    # the PyTorch reference).  One exact reciprocal per row.
    denom = jnp.sum(a, axis=1, keepdims=True)          # (TB, 1, 1)
    a = a * pl.reciprocal(denom, approx=False) + 1e-10

    # weighted_input = x * a; sum over the step dim -> (TB, 1, F); the multiply
    # is a lane-broadcast of the (TB, S, 1) attention vector.
    o_ref[...] = jnp.sum(x * a, axis=1, keepdims=True).astype(o_ref.dtype)


def _attention_kernel_mask(x_ref, w_ref, b_ref, m_ref, o_ref):
    """Same as above, with an explicit (TB, S, 1) mask (cast to f32 in-kernel)."""
    x = x_ref[...].astype(jnp.float32)
    w = w_ref[...].astype(jnp.float32)
    b = b_ref[...].astype(jnp.float32)
    mask = m_ref[...].astype(jnp.float32)              # (TB, S, 1)

    eij = jnp.sum(x * w, axis=-1, keepdims=True)
    a = jnp.exp(jnp.tanh(eij + b))
    a = a * mask
    denom = jnp.sum(a, axis=1, keepdims=True)
    a = a * pl.reciprocal(denom, approx=False) + 1e-10
    o_ref[...] = jnp.sum(x * a, axis=1, keepdims=True).astype(o_ref.dtype)


# ----------------------------------------------------------------------------
# Tiling / VMEM planning
# ----------------------------------------------------------------------------
def _vmem_plan():
    """Per-generation (vmem_limit_bytes, block footprint budget, min grid steps)."""
    try:
        cap = getattr(pltpu.get_tpu_info(), "vmem_capacity_bytes", 64 << 20)
    except Exception:  # be conservative if the query is unavailable
        cap = 64 << 20
    if cap >= (128 << 20):
        # v5e / v6e: 128 MiB VMEM, single TensorCore -> biggest block wins.
        return 96 << 20, 64 << 20, 1
    # v7x-class: 64 MiB physical VMEM, 2 TensorCores -> keep blocks modest and
    # guarantee enough grid steps for megacore sharding.
    return 48 << 20, 32 << 20, 4


def _choose_batch_tile(B, S, F, x_itemsize, mask_itemsize,
                       block_budget, min_grid_steps):
    """Largest batch tile whose in-kernel footprint stays under block_budget.

    Counts the double-buffered x block in its own dtype, ~3 block-sized f32
    temporaries the body materializes (x cast, x*w, x*a), the double-buffered
    f32 output block and (if present) the mask block + its f32 cast.
    """
    per_row = (
        2 * S * F * x_itemsize        # x block, double buffered
        + 3 * S * F * 4               # f32 temporaries over the x block
        + 2 * F * 4                   # output block (f32), double buffered
        + 2 * S * (mask_itemsize + 4)  # mask block + f32 cast (0 if no mask)
    )
    rows = max(1, int(block_budget // per_row))
    rows = min(rows, B)
    if min_grid_steps > 1:
        # Keep >= min_grid_steps grid steps so both TensorCores get work (v7x).
        rows = min(rows, max(1, int(pl.cdiv(B, min_grid_steps))))
    # No sublane floor: every block keeps the batch in its leading (free) dim.
    return max(1, rows)


# ----------------------------------------------------------------------------
# Wrapper
# ----------------------------------------------------------------------------
def attention_forward(x, weight, bias, mask=None, *, batch_tile=None):
    """x: (B, S, F), weight: (F, 1), bias: (S,), mask: (B, S) or None.

    Returns (B, F) float32, matching the PyTorch module's forward.
    """
    B, S, F = x.shape
    # Row-major-free metadata reshapes: (F,1)->(1,1,F) lane-dense weight,
    # (S,)->(1,S,1) sublane-major bias.  Dtypes are cast in-kernel.
    w3d = weight.reshape(1, 1, F)
    b3d = bias.reshape(1, S, 1)

    vmem_limit, block_budget, min_steps = _vmem_plan()
    if batch_tile is None:
        mask_isz = jnp.dtype(mask.dtype).itemsize if mask is not None else 0
        batch_tile = _choose_batch_tile(
            B, S, F, jnp.dtype(x.dtype).itemsize, mask_isz,
            block_budget, min_steps)
    TB = int(batch_tile)
    grid = (pl.cdiv(B, TB),)

    x_spec = pl.BlockSpec((TB, S, F), lambda i: (i, 0, 0))
    w_spec = pl.BlockSpec((1, 1, F), lambda i: (0, 0, 0))   # resident across steps
    b_spec = pl.BlockSpec((1, S, 1), lambda i: (0, 0, 0))   # resident across steps
    o_spec = pl.BlockSpec((TB, 1, F), lambda i: (i, 0, 0))

    cparams = pltpu.CompilerParams(
        dimension_semantics=("parallel",),   # megacore sharding on v7x
        vmem_limit_bytes=vmem_limit,
    )
    out_shape = jax.ShapeDtypeStruct((B, 1, F), jnp.float32)

    if mask is None:
        # Static branch: no synthetic ones-mask, one fewer DMA stream.
        out = pl.pallas_call(
            _attention_kernel_nomask,
            out_shape=out_shape,
            grid=grid,
            in_specs=[x_spec, w_spec, b_spec],
            out_specs=o_spec,
            compiler_params=cparams,
        )(x, w3d, b3d)
    else:
        # Free metadata reshape; mask keeps its native (narrow) dtype and is
        # cast to f32 inside the kernel.
        m3d = mask.reshape(B, S, 1)
        m_spec = pl.BlockSpec((TB, S, 1), lambda i: (i, 0, 0))
        out = pl.pallas_call(
            _attention_kernel_mask,
            out_shape=out_shape,
            grid=grid,
            in_specs=[x_spec, w_spec, b_spec, m_spec],
            out_specs=o_spec,
            compiler_params=cparams,
        )(x, w3d, b3d, m3d)

    return out.reshape(B, F)   # free metadata reshape


def reference_forward(x, weight, bias, mask=None):
    """Pure-JAX reference mirroring the PyTorch forward exactly (f32 math)."""
    B, S, F = x.shape
    eij = (x.reshape(-1, F) @ weight).reshape(B, S) + bias[None, :]
    a = jnp.exp(jnp.tanh(eij))
    if mask is not None:
        a = a * mask.astype(jnp.float32)
    a = a / jnp.sum(a, axis=1, keepdims=True) + 1e-10
    return jnp.sum(x * a[:, :, None], axis=1)


if __name__ == "__main__":
    # Module hyper-params (small, consistent with the forward pass).
    batch, step_dim, feature_dim = 2, 8, 32

    key = jax.random.PRNGKey(0)
    kx, kw, kb, kx2, km = jax.random.split(key, 5)

    # nn.init.xavier_uniform_ on (F, 1) and zero bias of shape (step_dim,),
    # as in the module's __init__.
    xavier_bound = (6.0 / (feature_dim + 1)) ** 0.5
    weight = jax.random.uniform(kw, (feature_dim, 1), jnp.float32,
                                minval=-xavier_bound, maxval=xavier_bound)
    bias = jnp.zeros((step_dim,), dtype=jnp.float32)

    x = jax.random.normal(kx, (batch, step_dim, feature_dim), dtype=jnp.float32)

    # 1) maskless path (auto tile sizing)
    out = jax.block_until_ready(attention_forward(x, weight, bias))
    ref = reference_forward(x, weight, bias)
    assert out.shape == (batch, feature_dim)
    assert jnp.allclose(out, ref, atol=1e-5, rtol=1e-5), "mismatch vs reference (no mask)"

    # 2) masked + gridded path with a ragged final batch tile (B=20, TB=8),
    #    mask in a narrow native dtype (bf16) cast to f32 in-kernel.
    B2 = 20
    bias2 = 0.1 * jax.random.normal(kb, (step_dim,), dtype=jnp.float32)
    x2 = jax.random.normal(kx2, (B2, step_dim, feature_dim), dtype=jnp.float32)
    mask2 = (jax.random.uniform(km, (B2, step_dim)) > 0.3)
    mask2 = mask2.at[:, 0].set(True)   # avoid fully-masked rows (ref divides by 0)
    mask2 = mask2.astype(jnp.bfloat16)
    out2 = jax.block_until_ready(
        attention_forward(x2, weight, bias2, mask2, batch_tile=8))
    ref2 = reference_forward(x2, weight, bias2, mask2)
    assert out2.shape == (B2, feature_dim)
    assert jnp.allclose(out2, ref2, atol=1e-5, rtol=1e-5), "mismatch vs reference (mask)"

    print("KERNEL_OK")
</pallas_src>

<mosaic_0001>
module attributes {stable_mosaic.version = 11 : i64} {
  func.func @_attention_kernel_nomask(%arg0: i32, %arg1: memref<1x8x32xf32, #tpu.memory_space<vmem>>, %arg2: memref<1x1x32xf32, #tpu.memory_space<vmem>>, %arg3: memref<1x8x1xf32, #tpu.memory_space<vmem>>, %arg4: memref<1x1x32xf32, #tpu.memory_space<vmem>>) attributes {dimension_semantics = [#tpu.dimension_semantics<parallel>], iteration_bounds = array<i64: 2>, scalar_prefetch = 0 : i64, scratch_operands = 0 : i64, tpu.core_type = #tpu.core_type<tc>, window_params = [{transform_indices = @transform_0, window_bounds = array<i64: 1, 8, 32>}, {pipeline_mode = #tpu.pipeline_mode<synchronous>, transform_indices = @transform_1, window_bounds = array<i64: 1, 1, 32>}, {pipeline_mode = #tpu.pipeline_mode<synchronous>, transform_indices = @transform_2, window_bounds = array<i64: 1, 8, 1>}, {transform_indices = @transform_3, window_bounds = array<i64: 1, 1, 32>}]} {
    %c0 = arith.constant 0 : index
    %c0_0 = arith.constant 0 : index
    %c0_1 = arith.constant 0 : index
    %0 = vector.load %arg1[%c0, %c0_0, %c0_1] : memref<1x8x32xf32, #tpu.memory_space<vmem>>, vector<1x8x32xf32>
    %c0_2 = arith.constant 0 : index
    %c0_3 = arith.constant 0 : index
    %c0_4 = arith.constant 0 : index
    %1 = vector.load %arg2[%c0_2, %c0_3, %c0_4] : memref<1x1x32xf32, #tpu.memory_space<vmem>>, vector<1x1x32xf32>
    %c0_5 = arith.constant 0 : index
    %c0_6 = arith.constant 0 : index
    %c0_7 = arith.constant 0 : index
    %2 = vector.load %arg3[%c0_5, %c0_6, %c0_7] : memref<1x8x1xf32, #tpu.memory_space<vmem>>, vector<1x8x1xf32>
    %3 = vector.broadcast %1 : vector<1x1x32xf32> to vector<1x8x32xf32>
    %4 = arith.mulf %0, %3 : vector<1x8x32xf32>
    %cst = arith.constant dense<0.000000e+00> : vector<1x8xf32>
    %5 = vector.multi_reduction <add>, %4, %cst [2] : vector<1x8x32xf32> to vector<1x8xf32>
    %6 = vector.shape_cast %5 : vector<1x8xf32> to vector<1x8x1xf32>
    %7 = arith.addf %6, %2 : vector<1x8x1xf32>
    %8 = math.tanh %7 : vector<1x8x1xf32>
    %9 = math.exp %8 : vector<1x8x1xf32>
    %cst_8 = arith.constant dense<0.000000e+00> : vector<1x1xf32>
    %10 = vector.multi_reduction <add>, %9, %cst_8 [1] : vector<1x8x1xf32> to vector<1x1xf32>
    %11 = vector.shape_cast %10 : vector<1x1xf32> to vector<1x1x1xf32>
    %12 = tpu.reciprocal %11 : vector<1x1x1xf32> -> vector<1x1x1xf32>
    %13 = vector.broadcast %12 : vector<1x1x1xf32> to vector<1x8x1xf32>
    %14 = arith.mulf %9, %13 : vector<1x8x1xf32>
    %cst_9 = arith.constant 1.000000e-10 : f32
    %15 = vector.broadcast %cst_9 : f32 to vector<1x8x1xf32>
    %16 = arith.addf %14, %15 : vector<1x8x1xf32>
    %17 = vector.broadcast %16 : vector<1x8x1xf32> to vector<1x8x32xf32>
    %18 = arith.mulf %0, %17 : vector<1x8x32xf32>
    %cst_10 = arith.constant dense<0.000000e+00> : vector<1x32xf32>
    %19 = vector.multi_reduction <add>, %18, %cst_10 [1] : vector<1x8x32xf32> to vector<1x32xf32>
    %20 = vector.shape_cast %19 : vector<1x32xf32> to vector<1x1x32xf32>
    %c0_11 = arith.constant 0 : index
    %c0_12 = arith.constant 0 : index
    %c0_13 = arith.constant 0 : index
    %21 = vector.load %arg4[%c0_11, %c0_12, %c0_13] : memref<1x1x32xf32, #tpu.memory_space<vmem>>, vector<1x1x32xf32>
    tpu.vector_store %arg4[%c0_11, %c0_12, %c0_13], %20 {strides = array<i32>} : memref<1x1x32xf32, #tpu.memory_space<vmem>>, vector<1x1x32xf32>,
    return
  }
  func.func @transform_0(%arg0: i32) -> (i32, i32, i32) {
    %c0_i32 = arith.constant 0 : i32
    %c0_i32_0 = arith.constant 0 : i32
    %c0_i32_1 = arith.constant 0 : i32
    return %arg0, %c0_i32, %c0_i32_0 : i32, i32, i32
  }
  func.func @transform_1(%arg0: i32) -> (i32, i32, i32) {
    %c0_i32 = arith.constant 0 : i32
    %c0_i32_0 = arith.constant 0 : i32
    %c0_i32_1 = arith.constant 0 : i32
    %c0_i32_2 = arith.constant 0 : i32
    return %c0_i32, %c0_i32_0, %c0_i32_1 : i32, i32, i32
  }
  func.func @transform_2(%arg0: i32) -> (i32, i32, i32) {
    %c0_i32 = arith.constant 0 : i32
    %c0_i32_0 = arith.constant 0 : i32
    %c0_i32_1 = arith.constant 0 : i32
    %c0_i32_2 = arith.constant 0 : i32
    return %c0_i32, %c0_i32_0, %c0_i32_1 : i32, i32, i32
  }
  func.func @transform_3(%arg0: i32) -> (i32, i32, i32) {
    %c0_i32 = arith.constant 0 : i32
    %c0_i32_0 = arith.constant 0 : i32
    %c0_i32_1 = arith.constant 0 : i32
    return %arg0, %c0_i32, %c0_i32_0 : i32, i32, i32
  }
}

</mosaic_0001>

<llo_original>
// kernel: tpu_custom_call.1
$region0: #{tpu_custom_call.1}
  #allocation0 [shape = 'u32[]', space=smem, size = 0x4, offset = 0x4, fixed_abs, tag = 'smem constant byte address 0x4 - core index']
  #allocation1 [shape = 'u32[144,128]{1,0:T(1,128)}', space=vmem, size = 0x12000, scoped, tag = 'internal scratch']
  %s0 = inlined_call_operand.hbm [shape: f32[2,8,32], index: 0, kind: input, shape index: {}]
  %s1 = inlined_call_operand.vmem [shape: f32[1,1,32], index: 1, kind: input, shape index: {}]
  %s2 = inlined_call_operand.vmem [shape: f32[1,8,1], index: 2, kind: input, shape index: {}]
  %s3 = inlined_call_operand.hbm [shape: f32[2,1,32], index: 3, kind: output, shape index: {}]
  %s4 = sld [smem:[#allocation0]]
  $region49: #{tpu_custom_call.1} parent=0
    _
  %s6 = ssub.s32 1, %s4
  %s7 = scalar_select 0, %s6, %s4
  $region1: #{tpu_custom_call.1} parent=0
    #allocation2 [shape = 'u8[8192]{0}', space=vmem, size = 0x2000, scoped, tag = 'input window, operand 0']
    #allocation3 [shape = 's32[2]{0}', space=sflag, size = 0x8, scoped, tag = 'scoped memory for tpu_custom_call.1']
    #allocation4 [shape = 's32[2]{0}', space=sflag, size = 0x8, scoped, tag = 'scoped memory for tpu_custom_call.1']
    #allocation5 [shape = 'u8[1024]{0}', space=vmem, size = 0x400, scoped, tag = 'output window, operand 0']
    %8 = vsyncpa [#allocation3], 0
    %s9 = scalar_lea.sflag [#allocation3], 1
    %10 = vsyncpa %s9, 0
    %11 = vsyncpa [#allocation4], 0
    %s12 = scalar_lea.sflag [#allocation4], 1
    %13 = vsyncpa %s12, 0
    loop: start=0, step=1, limit=4
    $region2: #{tpu_custom_call.1} parent=1 // loop_pre_header
      _
    $region3: #{tpu_custom_call.1} parent=1 // loop_header
      %s15 = sphi 0, %s19
      %p16 = scmp.ge.s32.totalorder %s15, 4
      %s25 = sphi 0, %s27
      %s28 = sphi 0, %s25
      %s29 = sphi 0, %s28
      %s45 = sphi 0, %s29
      %s49 = sphi 0, %s49
      %s51 = sphi 0, %s49
      %s52 = sphi 0, %s51
      %s66 = sphi 0, %s52
      %s70 = sphi 0, %s70
      %s72 = sphi 0, %s70
      %s73 = sphi 0, %s72
      %s87 = sphi 0, %s73
      %s93 = sphi 0, %s95
      %s96 = sphi 0, %s93
      %s97 = sphi 0, %s96
      %s113 = sphi 0, %s97
    $region4: #{tpu_custom_call.1} parent=1 // loop_header_branch
      %18 = sbr.rel (%p16) target = $region8
    $region5: #{tpu_custom_call.1} parent=1 // loop_body
      %s20 = ssub.s32 %s15, 1
      %s21 = ssub.s32 %s15, 2
      %s22 = sadd.s32 %s15, 1
      %s23 = ssub.s32 %s15, %s22
      %p24 = scmp.eq.s32.totalorder %s23, 0
      %s26 = sadd.s32 %s25, 1
      %s27 = scalar_select %p24, %s25, %s26
      %p30 = pneg %p24
      %p31 = scmp.eq.s32.totalorder %s15, 1
      %p32 = por %p30, %p31
      %p33 = scmp.ne.s32.totalorder %s25, %s28
      %p34 = scmp.eq.s32.totalorder %s15, 0
      %p35 = por %p33, %p34
      %p36 = scmp.ne.s32.totalorder %s25, %s28
      %p37 = scmp.eq.s32.totalorder %s20, 1
      %p38 = por %p36, %p37
      %p39 = scmp.ne.s32.totalorder %s28, %s29
      %p40 = scmp.eq.s32.totalorder %s20, 0
      %p41 = por %p39, %p40
      %p42 = scmp.ne.s32.totalorder %s28, %s29
      %p43 = scmp.eq.s32.totalorder %s21, 1
      %p44 = por %p42, %p43
      %p46 = scmp.ne.s32.totalorder %s29, %s45
      %p47 = scmp.eq.s32.totalorder %s21, 0
      %p48 = por %p46, %p47
      %s50 = sadd.s32 %s49, 1
      %p53 = scmp.eq.s32.totalorder %s15, 1
      %p54 = scmp.ne.s32.totalorder %s49, %s51
      %p55 = scmp.eq.s32.totalorder %s15, 0
      %p56 = por %p54, %p55
      %p57 = scmp.ne.s32.totalorder %s49, %s51
      %p58 = scmp.eq.s32.totalorder %s20, 1
      %p59 = por %p57, %p58
      %p60 = scmp.ne.s32.totalorder %s51, %s52
      %p61 = scmp.eq.s32.totalorder %s20, 0
      %p62 = por %p60, %p61
      %p63 = scmp.ne.s32.totalorder %s51, %s52
      %p64 = scmp.eq.s32.totalorder %s21, 1
      %p65 = por %p63, %p64
      %p67 = scmp.ne.s32.totalorder %s52, %s66
      %p68 = scmp.eq.s32.totalorder %s21, 0
      %p69 = por %p67, %p68
      %s71 = sadd.s32 %s70, 1
      %p74 = scmp.eq.s32.totalorder %s15, 1
      %p75 = scmp.ne.s32.totalorder %s70, %s72
      %p76 = scmp.eq.s32.totalorder %s15, 0
      %p77 = por %p75, %p76
      %p78 = scmp.ne.s32.totalorder %s70, %s72
      %p79 = scmp.eq.s32.totalorder %s20, 1
      %p80 = por %p78, %p79
      %p81 = scmp.ne.s32.totalorder %s72, %s73
      %p82 = scmp.eq.s32.totalorder %s20, 0
      %p83 = por %p81, %p82
      %p84 = scmp.ne.s32.totalorder %s72, %s73
      %p85 = scmp.eq.s32.totalorder %s21, 1
      %p86 = por %p84, %p85
      %p88 = scmp.ne.s32.totalorder %s73, %s87
      %p89 = scmp.eq.s32.totalorder %s21, 0
      %p90 = por %p88, %p89
      %s91 = ssub.s32 %s15, %s22
      %p92 = scmp.eq.s32.totalorder %s91, 0
      %s94 = sadd.s32 %s93, 1
      %s95 = scalar_select %p92, %s93, %s94
      %p98 = pneg %p92
      %p99 = scmp.eq.s32.totalorder %s15, 1
      %p100 = por %p98, %p99
      %p101 = scmp.ne.s32.totalorder %s93, %s96
      %p102 = scmp.eq.s32.totalorder %s15, 0
      %p103 = por %p101, %p102
      %p104 = scmp.ne.s32.totalorder %s93, %s96
      %p105 = scmp.eq.s32.totalorder %s20, 1
      %p106 = por %p104, %p105
      %p107 = scmp.ne.s32.totalorder %s96, %s97
      %p108 = scmp.eq.s32.totalorder %s20, 0
      %p109 = por %p107, %p108
      %p110 = scmp.ne.s32.totalorder %s96, %s97
      %p111 = scmp.eq.s32.totalorder %s21, 1
      %p112 = por %p110, %p111
      %p114 = scmp.ne.s32.totalorder %s97, %s113
      %p115 = scmp.eq.s32.totalorder %s21, 0
      %p116 = por %p114, %p115
      %p117 = scmp.le.s32.totalorder 1, %s15
      %p118 = scmp.lt.s32.totalorder %s15, 3
      %p119 = pnand %p117, %p118
      %p120 = pneg %p119
      // Predicated region
      $region9: #{tpu_custom_call.1} parent=5 // pred_check
        _
      $region10: #{tpu_custom_call.1} parent=5 // pred_check_branch
        %122 = sbr.rel (%p119) target = $region12
      $region11: #{tpu_custom_call.1} parent=5 // pred_region
        %s123 = ssub.s32 %s15, 1
        // Predicated region
        $region13: #{tpu_custom_call.1} parent=11 // pred_check
          %p124 = pneg %p62
        $region14: #{tpu_custom_call.1} parent=11 // pred_check_branch
          %126 = sbr.rel (%p124) target = $region16
        $region15: #{tpu_custom_call.1} parent=11 // pred_region
          _
        $region16: #{tpu_custom_call.1} parent=11 // pred_fallthru
          _
        // Predicated region
        $region17: #{tpu_custom_call.1} parent=11 // pred_check
          %p127 = pneg %p83
        $region18: #{tpu_custom_call.1} parent=11 // pred_check_branch
          %129 = sbr.rel (%p127) target = $region20
        $region19: #{tpu_custom_call.1} parent=11 // pred_region
          _
        $region20: #{tpu_custom_call.1} parent=11 // pred_fallthru
          _
      $region12: #{tpu_custom_call.1} parent=5 // pred_fallthru
        _
      %p130 = scmp.lt.s32.totalorder %s15, 2
      // Predicated region
      $region21: #{tpu_custom_call.1} parent=5 // pred_check
        %p131 = pneg %p130
      $region22: #{tpu_custom_call.1} parent=5 // pred_check_branch
        %133 = sbr.rel (%p131) target = $region24
      $region23: #{tpu_custom_call.1} parent=5 // pred_region
        // Predicated region
        $region25: #{tpu_custom_call.1} parent=23 // pred_check
          %p134 = pneg %p35
        $region26: #{tpu_custom_call.1} parent=23 // pred_check_branch
          %136 = sbr.rel (%p134) target = $region28
        $region27: #{tpu_custom_call.1} parent=23 // pred_region
          %s137 = sand.u32 %s25, 1
          %s138 = scalar_lea.sflag [#allocation3], %s137
          %s139 = sand.u32 %s25, 1
          %s140 = smul.addr %s139, 8
          %s141 = scalar_lea.vmem [#allocation2], %s140
          %s143 = ssub.s32 128, 128
          %144 = vsyncadd %s138, %s143
          %s145 = smul.addr %s15, 128
          %s146 = scalar_lea.hbm %s0, %s145
          %s148 = sshll.u32 %s141, 4
          %s149 = int_to_ptr.vmem [resolvable:$true] %s148
          %151 = dma.hbm_to_vmem [thread:$0]  %s146, 128, %s149, %s138
        $region28: #{tpu_custom_call.1} parent=23 // pred_fallthru
          _
      $region24: #{tpu_custom_call.1} parent=5 // pred_fallthru
        _
      %p152 = scmp.le.s32.totalorder 1, %s15
      %p153 = scmp.lt.s32.totalorder %s15, 3
      %p154 = pnand %p152, %p153
      %p155 = pneg %p154
      // Predicated region
      $region29: #{tpu_custom_call.1} parent=5 // pred_check
        _
      $region30: #{tpu_custom_call.1} parent=5 // pred_check_branch
        %157 = sbr.rel (%p154) target = $region32
      $region31: #{tpu_custom_call.1} parent=5 // pred_region
        %s158 = ssub.s32 %s15, 1
        %s159 = sand.u32 %s28, 1
        %s160 = scalar_lea.sflag [#allocation3], %s159
        %s161 = sand.u32 %s28, 1
        %s162 = smul.addr %s161, 8
        %s163 = scalar_lea.vmem [#allocation2], %s162
        // Predicated region
        $region33: #{tpu_custom_call.1} parent=31 // pred_check
          %p164 = pneg %p41
        $region34: #{tpu_custom_call.1} parent=31 // pred_check_branch
          %166 = sbr.rel (%p164) target = $region36
        $region35: #{tpu_custom_call.1} parent=31 // pred_region
          %167 = dma.done %s160, 128
        $region36: #{tpu_custom_call.1} parent=31 // pred_fallthru
          _
        %s168 = sand.u32 %s28, 1
        %s169 = scalar_lea.sflag [#allocation3], %s168
        %s170 = sand.u32 %s28, 1
        %s171 = smul.addr %s170, 8
        %s172 = scalar_lea.vmem [#allocation2], %s171
        %p173 = pneg %p41
        %p174 = pneg %p38
        %p175 = pneg %p62
        %p176 = pneg %p59
        %p177 = pneg %p83
        %p178 = pneg %p80
        %p179 = pneg %p109
        %p180 = pneg %p106
        %s181 = sand.u32 %s96, 1
        %s182 = scalar_lea.sflag [#allocation4], %s181
        %s183 = sand.u32 %s96, 1
        %s184 = scalar_lea.vmem [#allocation5], %s183
        %v185 = vld [vmem:[%s163] sm:$0xff]
        %v186 = vld [vmem:[%s1] sm:$0x1]
        %v187 = vld [vmem:[%s2] sm:$0xff]
        %v189 = vlaneseq
        %v190 = vshrl.u32 %v189, 7
        %v191 = vsub.s32 0, %v190
        %v192 = vrot.slane %v186, %v191
        %v194 = vmul.f32 %v185, %v192
        %vm195 = vcmask 261120
        %v196 = vsel %vm195, %v194, 0.0
        %197 = vadd.xlane.f32.xlu0 %v196
        %v198 = vpop.xlane.xlu0 %197
        %v199 = vadd.f32 %v198, %v187
        %v200 = vtanh.pop %v199
        %v201 = vmul.f32 %v200, 1.442695
        %v202 = vpow.pop %v201
        %vm203 = vcmask 7168
        %v204 = vsel %vm203, %v202, 0.0
        %v205 = vrot.slane %v204, 4
        %v206 = vadd.f32 %v204, %v205
        %v207 = vrot.slane %v206, 2
        %v208 = vadd.f32 %v206, %v207
        %v209 = vrot.slane %v208, 1
        %v210 = vadd.f32 %v208, %v209
        %v211 = vrcp.pop %v210
        %v212 = vmul.f32 %v202, %v211
        %v213 = vadd.f32 %v212, 1e-10
        %215 = vset.pattern.permute.xlu0 0
        %216 = vperm.xlu0 %215, %v213
        %v217 = vpop.permute.xlu0 %216
        %v219 = vmul.f32 %v185, %v217
        %v220 = vsel %vm195, %v219, 0.0
        %v221 = vrot.slane %v220, 4
        %v222 = vadd.f32 %v220, %v221
        %v223 = vrot.slane %v222, 2
        %v224 = vadd.f32 %v222, %v223
        %v225 = vrot.slane %v224, 1
        %v226 = vadd.f32 %v224, %v225
        %vm227 = vcmask 253952
        %228 = vst.msk [vmem:[%s184] sm:$0x1] %vm227, %v226
        %s229 = sand.u32 %s96, 1
        %s230 = scalar_lea.sflag [#allocation4], %s229
        %s231 = sand.u32 %s96, 1
        %s232 = scalar_lea.vmem [#allocation5], %s231
        // Predicated region
        $region37: #{tpu_custom_call.1} parent=31 // pred_check
          %p233 = pneg %p106
        $region38: #{tpu_custom_call.1} parent=31 // pred_check_branch
          %235 = sbr.rel (%p233) target = $region40
        $region39: #{tpu_custom_call.1} parent=31 // pred_region
          %s237 = ssub.s32 16, 16
          %238 = vsyncadd %s230, %s237
          %s239 = smul.addr %s20, 16
          %s240 = scalar_lea.hbm %s3, %s239
          %s242 = sshll.u32 %s232, 4
          %s243 = int_to_ptr.vmem [resolvable:$true] %s242
          %245 = dma.vmem_to_hbm [thread:$0]  %s243, 16, %s240, %s230
        $region40: #{tpu_custom_call.1} parent=31 // pred_fallthru
          _
      $region32: #{tpu_custom_call.1} parent=5 // pred_fallthru
        _
      %p246 = scmp.le.s32.totalorder 2, %s15
      // Predicated region
      $region41: #{tpu_custom_call.1} parent=5 // pred_check
        %p247 = pneg %p246
      $region42: #{tpu_custom_call.1} parent=5 // pred_check_branch
        %249 = sbr.rel (%p247) target = $region44
      $region43: #{tpu_custom_call.1} parent=5 // pred_region
        %s250 = ssub.s32 %s15, 2
        // Predicated region
        $region45: #{tpu_custom_call.1} parent=43 // pred_check
          %p251 = pneg %p112
        $region46: #{tpu_custom_call.1} parent=43 // pred_check_branch
          %253 = sbr.rel (%p251) target = $region48
        $region47: #{tpu_custom_call.1} parent=43 // pred_region
          %s254 = sand.u32 %s97, 1
          %s255 = scalar_lea.sflag [#allocation4], %s254
          %s256 = sand.u32 %s97, 1
          %s257 = scalar_lea.vmem [#allocation5], %s256
          %258 = dma.done %s255, 16
        $region48: #{tpu_custom_call.1} parent=43 // pred_fallthru
          _
      $region44: #{tpu_custom_call.1} parent=5 // pred_fallthru
        _
    $region6: #{tpu_custom_call.1} parent=1 // loop_footer
      %s19 = sadd.s32 1, %s15
    $region7: #{tpu_custom_call.1} parent=1 // loop_footer_branch
      %14 = sbr.rel target = $region3
    $region8: #{tpu_custom_call.1} parent=1 // loop_exit
      _
    %259 = vsyncpa [#allocation3], 1
    %s260 = scalar_lea.sflag [#allocation3], 1
    %261 = vsyncpa %s260, 1
    %262 = vsyncpa [#allocation4], 1
    %s263 = scalar_lea.sflag [#allocation4], 1
    %264 = vsyncpa %s263, 1

</llo_original>
